<compile_context>
chip_gen: v5e
topology: v5e:2x2
jax: 0.10.0
libtpu: 0.0.40
codegen_flags: <defaults>
</compile_context>

<pallas_src>
import jax
import jax.numpy as jnp
from jax.experimental import pallas as pl
from jax.experimental.pallas import tpu as pltpu


def _round_up(x, m):
    return ((x + m - 1) // m) * m


def _pad2d(a, rows, cols):
    r, c = a.shape
    if r == rows and c == cols:
        return a
    return jnp.pad(a, ((0, rows - r), (0, cols - c)))


# ----------------------------------------------------------------------------
# Path 1: output_dim == 1  ->  VPU reduction kernel (no 1-wide MXU matmul).
# ----------------------------------------------------------------------------
def _affine_vpu_kernel(x_ref, w_ref, b_ref, o_ref):
    # x_ref: (TM, D) VMEM tile; w_ref: (1, D) VMEM (broadcast along sublanes,
    # same block every grid step -> stays resident); b_ref: (1,) f32 in SMEM.
    prod = x_ref[...] * w_ref[...]                       # VPU elementwise
    red = jnp.sum(prod, axis=-1, keepdims=True)          # XLU lane reduce
    o_ref[...] = (red + b_ref[0]).astype(o_ref.dtype)


def _forward_vpu(x, w, b, *, tm=None):
    M, K = x.shape
    tm = tm if tm is not None else min(256, _round_up(M, 8))
    Mp = _round_up(M, tm)

    xp = _pad2d(x, Mp, K)
    w_row = w.reshape(1, K).astype(jnp.float32)          # (D,1) -> (1,D)
    b_s = b.astype(jnp.float32)                          # (1,) scalar in SMEM

    out = pl.pallas_call(
        _affine_vpu_kernel,
        out_shape=jax.ShapeDtypeStruct((Mp, 1), jnp.float32),
        grid_spec=pltpu.PrefetchScalarGridSpec(
            num_scalar_prefetch=0,
            grid=(Mp // tm,),
            in_specs=[
                pl.BlockSpec((tm, K), lambda i: (i, 0)),
                pl.BlockSpec((1, K), lambda i: (0, 0)),          # VMEM-resident
                pl.BlockSpec(memory_space=pltpu.MemorySpace.SMEM),
            ],
            out_specs=pl.BlockSpec((tm, 1), lambda i: (i, 0)),
        ),
        compiler_params=pltpu.CompilerParams(
            dimension_semantics=("parallel",),            # shards over 2 TCs on v7x
        ),
    )(xp, w_row, b_s)
    return out[:M]


# ----------------------------------------------------------------------------
# Path 2: output_dim > 1  ->  tiled MXU matmul with K-reduction accumulator.
# ----------------------------------------------------------------------------
def _affine_mxu_kernel(x_ref, w_ref, b_ref, o_ref, acc_ref):
    k = pl.program_id(2)

    @pl.when(k == 0)
    def _init():
        acc_ref[...] = jnp.zeros_like(acc_ref)

    acc_ref[...] += jnp.dot(x_ref[...], w_ref[...],
                            preferred_element_type=jnp.float32)

    @pl.when(k == pl.num_programs(2) - 1)
    def _finalize():
        o_ref[...] = (acc_ref[...] + b_ref[...]).astype(o_ref.dtype)


def _forward_mxu(x, w, b, *, tm=None, tn=None, tk=None):
    M, K = x.shape
    N = w.shape[1]

    tm = tm if tm is not None else min(256, _round_up(M, 8))
    tn = tn if tn is not None else min(256, _round_up(N, 128))
    tk = tk if tk is not None else (512 if K > 512 else K)

    Mp = _round_up(M, tm)
    Np = _round_up(N, tn)
    Kp = _round_up(K, tk)

    xp = _pad2d(x, Mp, Kp)
    wp = _pad2d(w, Kp, Np)
    bp = jnp.pad(b.astype(jnp.float32), (0, Np - N)).reshape(1, Np)

    grid = (Mp // tm, Np // tn, Kp // tk)

    out = pl.pallas_call(
        _affine_mxu_kernel,
        out_shape=jax.ShapeDtypeStruct((Mp, Np), jnp.float32),
        grid_spec=pltpu.PrefetchScalarGridSpec(
            num_scalar_prefetch=0,
            grid=grid,
            in_specs=[
                pl.BlockSpec((tm, tk), lambda i, j, k: (i, k)),
                pl.BlockSpec((tk, tn), lambda i, j, k: (k, j)),
                pl.BlockSpec((1, tn), lambda i, j, k: (0, j)),
            ],
            out_specs=pl.BlockSpec((tm, tn), lambda i, j, k: (i, j)),
            scratch_shapes=[pltpu.VMEM((tm, tn), jnp.float32)],
        ),
        compiler_params=pltpu.CompilerParams(
            dimension_semantics=("parallel", "parallel", "arbitrary"),
        ),
    )(xp, wp, bp)
    return out[:M, :N]


def stock_predictor_forward(x, w, b, *, tm=None, tn=None, tk=None):
    """x: (batch, input_dim) f32; w: (input_dim, output_dim); b: (output_dim,)."""
    output_dim = w.shape[1]
    if output_dim == 1:
        return _forward_vpu(x, w, b, tm=tm)
    return _forward_mxu(x, w, b, tm=tm, tn=tn, tk=tk)


if __name__ == "__main__":
    key = jax.random.PRNGKey(0)
    k1, k2, k3, k4, k5, k6 = jax.random.split(key, 6)

    # --- Path 1: module default StockPredictor(input_dim=32, output_dim=1) --
    batch, input_dim, output_dim = 16, 32, 1
    x = jax.random.normal(k1, (batch, input_dim), dtype=jnp.float32)
    w = jax.random.normal(k2, (input_dim, output_dim), dtype=jnp.float32) * 0.1
    b = jax.random.normal(k3, (output_dim,), dtype=jnp.float32) * 0.1

    out = jax.block_until_ready(stock_predictor_forward(x, w, b, tm=8))
    ref = x @ w + b[None, :]
    assert out.shape == (batch, output_dim)
    assert jnp.allclose(out, ref, atol=1e-4, rtol=1e-4)

    # --- Path 2: wide head (lane-dense output) -> tiled MXU kernel ----------
    batch2, input_dim2, output_dim2 = 16, 256, 128
    x2 = jax.random.normal(k4, (batch2, input_dim2), dtype=jnp.float32)
    w2 = jax.random.normal(k5, (input_dim2, output_dim2), dtype=jnp.float32) * 0.05
    b2 = jax.random.normal(k6, (output_dim2,), dtype=jnp.float32) * 0.1

    out2 = jax.block_until_ready(
        stock_predictor_forward(x2, w2, b2, tm=8, tn=128, tk=128))
    ref2 = x2 @ w2 + b2[None, :]
    assert out2.shape == (batch2, output_dim2)
    assert jnp.allclose(out2, ref2, atol=1e-3, rtol=1e-3)

    print("KERNEL_OK")
</pallas_src>

<mosaic_0001>
module attributes {stable_mosaic.version = 11 : i64} {
  func.func @_affine_vpu_kernel(%arg0: i32, %arg1: memref<8x32xf32, #tpu.memory_space<vmem>>, %arg2: memref<1x32xf32, #tpu.memory_space<vmem>>, %arg3: memref<1xf32, #tpu.memory_space<smem>>, %arg4: memref<8x1xf32, #tpu.memory_space<vmem>>) attributes {dimension_semantics = [#tpu.dimension_semantics<parallel>], iteration_bounds = array<i64: 2>, scalar_prefetch = 0 : i64, scratch_operands = 0 : i64, tpu.core_type = #tpu.core_type<tc>, window_params = [{transform_indices = @transform_0, window_bounds = array<i64: 8, 32>}, {pipeline_mode = #tpu.pipeline_mode<synchronous>, transform_indices = @transform_1, window_bounds = array<i64: 1, 32>}, {transform_indices = @transform_2, window_bounds = array<i64: 1>}, {transform_indices = @transform_3, window_bounds = array<i64: 8, 1>}]} {
    %c0 = arith.constant 0 : index
    %c0_0 = arith.constant 0 : index
    %0 = vector.load %arg1[%c0, %c0_0] : memref<8x32xf32, #tpu.memory_space<vmem>>, vector<8x32xf32>
    %c0_1 = arith.constant 0 : index
    %c0_2 = arith.constant 0 : index
    %1 = vector.load %arg2[%c0_1, %c0_2] : memref<1x32xf32, #tpu.memory_space<vmem>>, vector<1x32xf32>
    %2 = vector.broadcast %1 : vector<1x32xf32> to vector<8x32xf32>
    %3 = arith.mulf %0, %2 : vector<8x32xf32>
    %cst = arith.constant dense<0.000000e+00> : vector<8xf32>
    %4 = vector.multi_reduction <add>, %3, %cst [1] : vector<8x32xf32> to vector<8xf32>
    %5 = vector.shape_cast %4 : vector<8xf32> to vector<8x1xf32>
    %c0_3 = arith.constant 0 : index
    %6 = memref.load %arg3[%c0_3] : memref<1xf32, #tpu.memory_space<smem>>
    %7 = vector.broadcast %6 : f32 to vector<8x1xf32>
    %8 = arith.addf %5, %7 : vector<8x1xf32>
    %c0_4 = arith.constant 0 : index
    %c0_5 = arith.constant 0 : index
    %9 = vector.load %arg4[%c0_4, %c0_5] : memref<8x1xf32, #tpu.memory_space<vmem>>, vector<8x1xf32>
    tpu.vector_store %arg4[%c0_4, %c0_5], %8 {strides = array<i32>} : memref<8x1xf32, #tpu.memory_space<vmem>>, vector<8x1xf32>,
    return
  }
  func.func @transform_0(%arg0: i32) -> (i32, i32) {
    %c0_i32 = arith.constant 0 : i32
    %c0_i32_0 = arith.constant 0 : i32
    return %arg0, %c0_i32 : i32, i32
  }
  func.func @transform_1(%arg0: i32) -> (i32, i32) {
    %c0_i32 = arith.constant 0 : i32
    %c0_i32_0 = arith.constant 0 : i32
    %c0_i32_1 = arith.constant 0 : i32
    return %c0_i32, %c0_i32_0 : i32, i32
  }
  func.func @transform_2(%arg0: i32) -> i32 {
    %c0_i32 = arith.constant 0 : i32
    %c0_i32_0 = arith.constant 0 : i32
    return %c0_i32 : i32
  }
  func.func @transform_3(%arg0: i32) -> (i32, i32) {
    %c0_i32 = arith.constant 0 : i32
    %c0_i32_0 = arith.constant 0 : i32
    return %arg0, %c0_i32 : i32, i32
  }
}

</mosaic_0001>

<llo_original>
// kernel: tpu_custom_call.1
$region0: #{tpu_custom_call.1}
  #allocation0 [shape = 'u32[]', space=smem, size = 0x4, offset = 0x4, fixed_abs, tag = 'smem constant byte address 0x4 - core index']
  #allocation1 [shape = 'u32[72,128]{1,0:T(1,128)}', space=vmem, size = 0x9000, scoped, tag = 'internal scratch']
  #allocation2 [shape = 'f32[1]{0:T(128)S(6)}', space=smem, size = 0x200, scoped, tag = 'scoped memory for tpu_custom_call.1']
  %s0 = inlined_call_operand.hbm [shape: f32[16,32], index: 0, kind: input, shape index: {}]
  %s1 = inlined_call_operand.vmem [shape: f32[1,32], index: 1, kind: input, shape index: {}]
  %s2 = inlined_call_operand.<no memory space> [shape: f32[1], index: 2, kind: input, shape index: {}]
  %s3 = inlined_call_operand.vmem [shape: f32[16,1], index: 3, kind: output, shape index: {}]
  %s4 = sld [smem:[#allocation0]]
  $region49: #{tpu_custom_call.1} parent=0
    _
  %s6 = ssub.s32 1, %s4
  %s7 = scalar_select 0, %s6, %s4
  %8 = sst [smem:[#allocation2]] %s2
  $region1: #{tpu_custom_call.1} parent=0
    #allocation3 [shape = 'u8[8192]{0}', space=vmem, size = 0x2000, scoped, tag = 'input window, operand 0']
    #allocation4 [shape = 's32[2]{0}', space=sflag, size = 0x8, scoped, tag = 'scoped memory for tpu_custom_call.1']
    %9 = vsyncpa [#allocation4], 0
    %s10 = scalar_lea.sflag [#allocation4], 1
    %11 = vsyncpa %s10, 0
    loop: start=0, step=1, limit=4
    $region2: #{tpu_custom_call.1} parent=1 // loop_pre_header
      _
    $region3: #{tpu_custom_call.1} parent=1 // loop_header
      %s13 = sphi 0, %s17
      %p14 = scmp.ge.s32.totalorder %s13, 4
      %s23 = sphi 0, %s25
      %s26 = sphi 0, %s23
      %s27 = sphi 0, %s26
      %s43 = sphi 0, %s27
      %s47 = sphi 0, %s47
      %s49 = sphi 0, %s47
      %s50 = sphi 0, %s49
      %s64 = sphi 0, %s50
      %s68 = sphi 0, %s68
      %s70 = sphi 0, %s68
      %s71 = sphi 0, %s70
      %s85 = sphi 0, %s71
      %s91 = sphi 0, %s93
      %s94 = sphi 0, %s91
      %s95 = sphi 0, %s94
      %s111 = sphi 0, %s95
    $region4: #{tpu_custom_call.1} parent=1 // loop_header_branch
      %16 = sbr.rel (%p14) target = $region8
    $region5: #{tpu_custom_call.1} parent=1 // loop_body
      %s18 = ssub.s32 %s13, 1
      %s19 = ssub.s32 %s13, 2
      %s20 = sadd.s32 %s13, 1
      %s21 = ssub.s32 %s13, %s20
      %p22 = scmp.eq.s32.totalorder %s21, 0
      %s24 = sadd.s32 %s23, 1
      %s25 = scalar_select %p22, %s23, %s24
      %p28 = pneg %p22
      %p29 = scmp.eq.s32.totalorder %s13, 1
      %p30 = por %p28, %p29
      %p31 = scmp.ne.s32.totalorder %s23, %s26
      %p32 = scmp.eq.s32.totalorder %s13, 0
      %p33 = por %p31, %p32
      %p34 = scmp.ne.s32.totalorder %s23, %s26
      %p35 = scmp.eq.s32.totalorder %s18, 1
      %p36 = por %p34, %p35
      %p37 = scmp.ne.s32.totalorder %s26, %s27
      %p38 = scmp.eq.s32.totalorder %s18, 0
      %p39 = por %p37, %p38
      %p40 = scmp.ne.s32.totalorder %s26, %s27
      %p41 = scmp.eq.s32.totalorder %s19, 1
      %p42 = por %p40, %p41
      %p44 = scmp.ne.s32.totalorder %s27, %s43
      %p45 = scmp.eq.s32.totalorder %s19, 0
      %p46 = por %p44, %p45
      %s48 = sadd.s32 %s47, 1
      %p51 = scmp.eq.s32.totalorder %s13, 1
      %p52 = scmp.ne.s32.totalorder %s47, %s49
      %p53 = scmp.eq.s32.totalorder %s13, 0
      %p54 = por %p52, %p53
      %p55 = scmp.ne.s32.totalorder %s47, %s49
      %p56 = scmp.eq.s32.totalorder %s18, 1
      %p57 = por %p55, %p56
      %p58 = scmp.ne.s32.totalorder %s49, %s50
      %p59 = scmp.eq.s32.totalorder %s18, 0
      %p60 = por %p58, %p59
      %p61 = scmp.ne.s32.totalorder %s49, %s50
      %p62 = scmp.eq.s32.totalorder %s19, 1
      %p63 = por %p61, %p62
      %p65 = scmp.ne.s32.totalorder %s50, %s64
      %p66 = scmp.eq.s32.totalorder %s19, 0
      %p67 = por %p65, %p66
      %s69 = sadd.s32 %s68, 1
      %p72 = scmp.eq.s32.totalorder %s13, 1
      %p73 = scmp.ne.s32.totalorder %s68, %s70
      %p74 = scmp.eq.s32.totalorder %s13, 0
      %p75 = por %p73, %p74
      %p76 = scmp.ne.s32.totalorder %s68, %s70
      %p77 = scmp.eq.s32.totalorder %s18, 1
      %p78 = por %p76, %p77
      %p79 = scmp.ne.s32.totalorder %s70, %s71
      %p80 = scmp.eq.s32.totalorder %s18, 0
      %p81 = por %p79, %p80
      %p82 = scmp.ne.s32.totalorder %s70, %s71
      %p83 = scmp.eq.s32.totalorder %s19, 1
      %p84 = por %p82, %p83
      %p86 = scmp.ne.s32.totalorder %s71, %s85
      %p87 = scmp.eq.s32.totalorder %s19, 0
      %p88 = por %p86, %p87
      %s89 = ssub.s32 %s13, %s20
      %p90 = scmp.eq.s32.totalorder %s89, 0
      %s92 = sadd.s32 %s91, 1
      %s93 = scalar_select %p90, %s91, %s92
      %p96 = pneg %p90
      %p97 = scmp.eq.s32.totalorder %s13, 1
      %p98 = por %p96, %p97
      %p99 = scmp.ne.s32.totalorder %s91, %s94
      %p100 = scmp.eq.s32.totalorder %s13, 0
      %p101 = por %p99, %p100
      %p102 = scmp.ne.s32.totalorder %s91, %s94
      %p103 = scmp.eq.s32.totalorder %s18, 1
      %p104 = por %p102, %p103
      %p105 = scmp.ne.s32.totalorder %s94, %s95
      %p106 = scmp.eq.s32.totalorder %s18, 0
      %p107 = por %p105, %p106
      %p108 = scmp.ne.s32.totalorder %s94, %s95
      %p109 = scmp.eq.s32.totalorder %s19, 1
      %p110 = por %p108, %p109
      %p112 = scmp.ne.s32.totalorder %s95, %s111
      %p113 = scmp.eq.s32.totalorder %s19, 0
      %p114 = por %p112, %p113
      %p115 = scmp.le.s32.totalorder 1, %s13
      %p116 = scmp.lt.s32.totalorder %s13, 3
      %p117 = pnand %p115, %p116
      %p118 = pneg %p117
      // Predicated region
      $region9: #{tpu_custom_call.1} parent=5 // pred_check
        _
      $region10: #{tpu_custom_call.1} parent=5 // pred_check_branch
        %120 = sbr.rel (%p117) target = $region12
      $region11: #{tpu_custom_call.1} parent=5 // pred_region
        %s121 = ssub.s32 %s13, 1
        // Predicated region
        $region13: #{tpu_custom_call.1} parent=11 // pred_check
          %p122 = pneg %p60
        $region14: #{tpu_custom_call.1} parent=11 // pred_check_branch
          %124 = sbr.rel (%p122) target = $region16
        $region15: #{tpu_custom_call.1} parent=11 // pred_region
          _
        $region16: #{tpu_custom_call.1} parent=11 // pred_fallthru
          _
        // Predicated region
        $region17: #{tpu_custom_call.1} parent=11 // pred_check
          %p125 = pneg %p81
        $region18: #{tpu_custom_call.1} parent=11 // pred_check_branch
          %127 = sbr.rel (%p125) target = $region20
        $region19: #{tpu_custom_call.1} parent=11 // pred_region
          _
        $region20: #{tpu_custom_call.1} parent=11 // pred_fallthru
          _
      $region12: #{tpu_custom_call.1} parent=5 // pred_fallthru
        _
      %p128 = scmp.lt.s32.totalorder %s13, 2
      // Predicated region
      $region21: #{tpu_custom_call.1} parent=5 // pred_check
        %p129 = pneg %p128
      $region22: #{tpu_custom_call.1} parent=5 // pred_check_branch
        %131 = sbr.rel (%p129) target = $region24
      $region23: #{tpu_custom_call.1} parent=5 // pred_region
        // Predicated region
        $region25: #{tpu_custom_call.1} parent=23 // pred_check
          %p132 = pneg %p33
        $region26: #{tpu_custom_call.1} parent=23 // pred_check_branch
          %134 = sbr.rel (%p132) target = $region28
        $region27: #{tpu_custom_call.1} parent=23 // pred_region
          %s135 = sand.u32 %s23, 1
          %s136 = scalar_lea.sflag [#allocation4], %s135
          %s137 = sand.u32 %s23, 1
          %s138 = smul.addr %s137, 8
          %s139 = scalar_lea.vmem [#allocation3], %s138
          %141 = vsyncadd %s136, 0
          %s142 = smul.addr %s13, 8
          %s143 = scalar_lea.hbm %s0, %s142
          %s145 = sshll.u32 %s143, 4
          %s146 = int_to_ptr.hbm [resolvable:$true] %s145
          %s147 = sshll.u32 %s139, 4
          %s148 = int_to_ptr.vmem [resolvable:$true] %s147
          %150 = dma.hbm_to_vmem [thread:$0]  %s146, 128, %s148, %s136
        $region28: #{tpu_custom_call.1} parent=23 // pred_fallthru
          _
      $region24: #{tpu_custom_call.1} parent=5 // pred_fallthru
        _
      %p151 = scmp.le.s32.totalorder 1, %s13
      %p152 = scmp.lt.s32.totalorder %s13, 3
      %p153 = pnand %p151, %p152
      %p154 = pneg %p153
      // Predicated region
      $region29: #{tpu_custom_call.1} parent=5 // pred_check
        _
      $region30: #{tpu_custom_call.1} parent=5 // pred_check_branch
        %156 = sbr.rel (%p153) target = $region32
      $region31: #{tpu_custom_call.1} parent=5 // pred_region
        %s157 = ssub.s32 %s13, 1
        %s158 = sand.u32 %s26, 1
        %s159 = scalar_lea.sflag [#allocation4], %s158
        %s160 = sand.u32 %s26, 1
        %s161 = smul.addr %s160, 8
        %s162 = scalar_lea.vmem [#allocation3], %s161
        // Predicated region
        $region33: #{tpu_custom_call.1} parent=31 // pred_check
          %p163 = pneg %p39
        $region34: #{tpu_custom_call.1} parent=31 // pred_check_branch
          %165 = sbr.rel (%p163) target = $region36
        $region35: #{tpu_custom_call.1} parent=31 // pred_region
          %167 = dma.done %s159, 128
        $region36: #{tpu_custom_call.1} parent=31 // pred_fallthru
          _
        %s168 = sand.u32 %s26, 1
        %s169 = scalar_lea.sflag [#allocation4], %s168
        %s170 = sand.u32 %s26, 1
        %s171 = smul.addr %s170, 8
        %s172 = scalar_lea.vmem [#allocation3], %s171
        %p173 = pneg %p39
        %p174 = pneg %p36
        %p175 = pneg %p60
        %p176 = pneg %p57
        %p177 = pneg %p81
        %p178 = pneg %p78
        %p179 = pneg %p107
        %p180 = pneg %p104
        %p181 = scmp.lt.s32.totalorder %s18, 1
        %s182 = scalar_select %p181, %s18, 1
        %s183 = smul.addr %s182, 8
        %s184 = scalar_lea.vmem %s3, %s183
        %p185 = scmp.lt.s32.totalorder %s18, 1
        %s186 = scalar_select %p185, %s18, 1
        %s187 = smul.addr %s186, 8
        %s188 = scalar_lea.vmem %s3, %s187
        %v189 = vld [vmem:[%s162] sm:$0xff]
        %v190 = vld [vmem:[%s1] sm:$0x1]
        %v192 = vperm.slane %v190, 0
        %v194 = vmul.f32 %v189, %v192
        %vm195 = vcmask 261120
        %v196 = vsel %vm195, %v194, 0.0
        %197 = vadd.xlane.f32.xlu0 %v196
        %v198 = vpop.xlane.xlu0 %197
        %s199 = sld [smem:[#allocation2]]
        %v200 = vstv %s199
        %v201 = vadd.f32 %v198, %v200
        %vm202 = vcmask 7168
        %203 = vst.msk [vmem:[%s188] sm:$0xff] %vm202, %v201
        %p204 = scmp.lt.s32.totalorder %s18, 1
        %s205 = scalar_select %p204, %s18, 1
        %s206 = smul.addr %s205, 8
        %s207 = scalar_lea.vmem %s3, %s206
        // Predicated region
        $region37: #{tpu_custom_call.1} parent=31 // pred_check
          %p208 = pneg %p104
        $region38: #{tpu_custom_call.1} parent=31 // pred_check_branch
          %210 = sbr.rel (%p208) target = $region40
        $region39: #{tpu_custom_call.1} parent=31 // pred_region
          _
        $region40: #{tpu_custom_call.1} parent=31 // pred_fallthru
          _
      $region32: #{tpu_custom_call.1} parent=5 // pred_fallthru
        _
      %p211 = scmp.le.s32.totalorder 2, %s13
      // Predicated region
      $region41: #{tpu_custom_call.1} parent=5 // pred_check
        %p212 = pneg %p211
      $region42: #{tpu_custom_call.1} parent=5 // pred_check_branch
        %214 = sbr.rel (%p212) target = $region44
      $region43: #{tpu_custom_call.1} parent=5 // pred_region
        %s215 = ssub.s32 %s13, 2
        // Predicated region
        $region45: #{tpu_custom_call.1} parent=43 // pred_check
          %p216 = pneg %p110
        $region46: #{tpu_custom_call.1} parent=43 // pred_check_branch
          %218 = sbr.rel (%p216) target = $region48
        $region47: #{tpu_custom_call.1} parent=43 // pred_region
          %p219 = scmp.lt.s32.totalorder %s19, 1
          %s220 = scalar_select %p219, %s19, 1
          %s221 = smul.addr %s220, 8
          %s222 = scalar_lea.vmem %s3, %s221
        $region48: #{tpu_custom_call.1} parent=43 // pred_fallthru
          _
      $region44: #{tpu_custom_call.1} parent=5 // pred_fallthru
        _
    $region6: #{tpu_custom_call.1} parent=1 // loop_footer
      %s17 = sadd.s32 1, %s13
    $region7: #{tpu_custom_call.1} parent=1 // loop_footer_branch
      %12 = sbr.rel target = $region3
    $region8: #{tpu_custom_call.1} parent=1 // loop_exit
      _
    %223 = vsyncpa [#allocation4], 1
    %s224 = scalar_lea.sflag [#allocation4], 1
    %225 = vsyncpa %s224, 1

</llo_original>
